<compile_context>
chip_gen: v7x
topology: tpu7x:2x2x1
jax: 0.10.0
libtpu: 0.0.40
codegen_flags: <defaults>
</compile_context>

<pallas_src>
import jax
import jax.numpy as jnp
from jax.experimental import pallas as pl
from jax.experimental.pallas import tpu as pltpu


def _make_cnam_kernel(wh_true: int, wh_pad: int, cr: int):
    """Builds the kernel with static spatial sizes baked in."""
    inv_wh = 1.0 / float(wh_true)
    needs_mask = wh_pad != wh_true

    def kernel(f5_ref, f_ref, wqk_ref, bqk_ref, wv_ref, bv_ref, out_ref):
        # f5_ref / f_ref / out_ref: (TB, C, WHp). Weights are tiny resident blocks.
        tb = f5_ref.shape[0]
        wqk = wqk_ref[...]          # (2Cr, C)  stacked [P_w; Z_w]
        bqk = bqk_ref[...]          # (2Cr, 1)  stacked [P_b; Z_b]
        wv = wv_ref[...]            # (C, C)
        bv = bv_ref[...]            # (C, 1)

        # Static unroll over the batch elements in this block.
        for i in range(tb):
            f5 = f5_ref[i]          # (C, WHp)
            f = f_ref[i]            # (C, WHp)

            # Fused P/Z 1x1 convs: one (2Cr, C) x (C, WHp) MXU pass that fills
            # the whole f32 sublane group.
            qk = jnp.dot(wqk, f5, preferred_element_type=jnp.float32) + bqk  # (2Cr, WHp)
            q = qk[:cr, :]          # (Cr, WHp)
            k = qk[cr:, :]          # (Cr, WHp)

            # mean_k(Q^T K)[p] == Q[:, p] . mean_k(K): no (WH, WH) scores.
            if needs_mask:
                # Padded spatial columns carry k == bias; exclude them from the mean.
                col = jax.lax.broadcasted_iota(jnp.int32, k.shape, 1)
                k = jnp.where(col < wh_true, k, 0.0)
            kbar = jnp.sum(k, axis=-1, keepdims=True) * inv_wh               # (Cr, 1)

            logits = jnp.sum(q * kbar, axis=0, keepdims=True)                # (1, WHp) lane-dense
            attn = jax.nn.sigmoid(logits)

            # Value 1x1 conv + broadcast spatial attention (sublane-broadcast
            # VPU mul, unmasked lane-dense store).
            v = jnp.dot(wv, f, preferred_element_type=jnp.float32) + bv      # (C, WHp)
            out_ref[i] = (v * attn).astype(out_ref.dtype)

    return kernel


def cnam_forward(F5, Fx, params):
    """F5, Fx: (B, C, W, H) float32 (NCHW). Returns (B, C, W, H)."""
    B, C, W, H = F5.shape
    WH = W * H
    WHp = ((WH + 127) // 128) * 128     # lane-dense spatial axis (multiple of 128)

    wp, bp = params["P_w"], params["P_b"]   # (Cr, C), (Cr, 1)
    wz, bz = params["Z_w"], params["Z_b"]   # (Cr, C), (Cr, 1)
    wv, bv = params["V_w"], params["V_b"]   # (C, C),  (C, 1)
    Cr = wp.shape[0]

    # Pack P/Z conv params into one stacked weight / bias (one MXU pass, fewer
    # tiny resident inputs).
    wqk = jnp.concatenate([wp, wz], axis=0)     # (2Cr, C)
    bqk = jnp.concatenate([bp, bz], axis=0)     # (2Cr, 1)

    f5_flat = F5.reshape(B, C, WH)
    f_flat = Fx.reshape(B, C, WH)
    if WHp != WH:
        pad = ((0, 0), (0, 0), (0, WHp - WH))
        f5_flat = jnp.pad(f5_flat, pad)
        f_flat = jnp.pad(f_flat, pad)

    # Batch blocking: amortize per-grid-step overhead while keeping the
    # double-buffered {F5, F, out} blocks well inside VMEM on all generations
    # (v7x: 64 MiB physical) and keeping >= 2 grid steps so both v7x
    # TensorCores get work.
    act_budget = 16 * 1024 * 1024               # bytes for pipelined activation blocks
    bytes_per_b = 6 * C * WHp * 4               # {f5, f, out} x double buffer, f32
    tb = int(max(1, min(8, act_budget // bytes_per_b, max(1, B // 2))))
    Bp = pl.cdiv(B, tb) * tb
    if Bp != B:
        padb = ((0, Bp - B), (0, 0), (0, 0))
        f5_flat = jnp.pad(f5_flat, padb)
        f_flat = jnp.pad(f_flat, padb)

    kernel = _make_cnam_kernel(WH, WHp, Cr)

    # Small resident blocks (constant block index across the grid).
    full = lambda shape: pl.BlockSpec(shape, lambda b: (0,) * len(shape))

    out_flat = pl.pallas_call(
        kernel,
        out_shape=jax.ShapeDtypeStruct((Bp, C, WHp), jnp.float32),
        grid_spec=pltpu.PrefetchScalarGridSpec(
            num_scalar_prefetch=0,
            grid=(Bp // tb,),
            in_specs=[
                pl.BlockSpec((tb, C, WHp), lambda b: (b, 0, 0)),   # F5 block
                pl.BlockSpec((tb, C, WHp), lambda b: (b, 0, 0)),   # F block
                full((2 * Cr, C)), full((2 * Cr, 1)),              # stacked P/Z conv
                full((C, C)), full((C, 1)),                        # value conv
            ],
            out_specs=pl.BlockSpec((tb, C, WHp), lambda b: (b, 0, 0)),
        ),
        compiler_params=pltpu.CompilerParams(
            dimension_semantics=("parallel",),      # batch blocks shard across TCs on v7x
            vmem_limit_bytes=32 * 1024 * 1024,      # explicit budget, safe on v7x's 64 MiB
        ),
    )(f5_flat, f_flat, wqk, bqk, wv, bv)

    return out_flat[:B, :, :WH].reshape(B, C, W, H)


def _reference(F5, Fx, params):
    """Pure-JAX reference mirroring the PyTorch forward (materializes S)."""
    B, C, W, H = F5.shape
    WH = W * H
    f5 = F5.reshape(B, C, WH)
    fx = Fx.reshape(B, C, WH)
    q = jnp.einsum("rc,bcp->brp", params["P_w"], f5) + params["P_b"][None]   # (B, Cr, WH)
    k = jnp.einsum("rc,bcp->brp", params["Z_w"], f5) + params["Z_b"][None]   # (B, Cr, WH)
    S = jnp.einsum("brq,brk->bqk", q, k)                                     # (B, WH, WH)
    attn = jax.nn.sigmoid(jnp.mean(S, axis=-1)).reshape(B, 1, W, H)
    v = jnp.einsum("oc,bcp->bop", params["V_w"], fx) + params["V_b"][None]
    return v.reshape(B, C, W, H) * attn


if __name__ == "__main__":
    # Small shapes consistent with the module: in_channels=4, out_channels=32,
    # reduction=8 -> Cr = 4.  Spatial 16x16, batch 2.
    B, C, W, H = 2, 4, 16, 16
    out_channels, reduction = 32, 8
    Cr = out_channels // reduction

    key = jax.random.PRNGKey(0)
    k1, k2, k3, k4, k5, k6, k7, k8 = jax.random.split(key, 8)

    params = {
        "P_w": jax.random.normal(k1, (Cr, C), jnp.float32) * 0.1,
        "P_b": jax.random.normal(k2, (Cr, 1), jnp.float32) * 0.1,
        "Z_w": jax.random.normal(k3, (Cr, C), jnp.float32) * 0.1,
        "Z_b": jax.random.normal(k4, (Cr, 1), jnp.float32) * 0.1,
        "V_w": jax.random.normal(k5, (C, C), jnp.float32) * 0.1,
        "V_b": jax.random.normal(k6, (C, 1), jnp.float32) * 0.1,
    }

    F5 = jax.random.normal(k7, (B, C, W, H), jnp.float32)
    Fx = jax.random.normal(k8, (B, C, W, H), jnp.float32)

    out = cnam_forward(F5, Fx, params)
    jax.block_until_ready(out)

    ref = _reference(F5, Fx, params)
    assert out.shape == (B, C, W, H)
    # Folding the key-mean into K reassociates the float sum -> keep 1e-4 tol.
    assert jnp.allclose(out, ref, atol=1e-4, rtol=1e-4), "mismatch vs reference"

    print("KERNEL_OK")
</pallas_src>

<mosaic_0001>
module attributes {stable_mosaic.version = 11 : i64} {
  func.func @kernel(%arg0: i32, %arg1: memref<1x4x256xf32, #tpu.memory_space<vmem>>, %arg2: memref<1x4x256xf32, #tpu.memory_space<vmem>>, %arg3: memref<8x4xf32, #tpu.memory_space<vmem>>, %arg4: memref<8x1xf32, #tpu.memory_space<vmem>>, %arg5: memref<4x4xf32, #tpu.memory_space<vmem>>, %arg6: memref<4x1xf32, #tpu.memory_space<vmem>>, %arg7: memref<1x4x256xf32, #tpu.memory_space<vmem>>) attributes {dimension_semantics = [#tpu.dimension_semantics<parallel>], iteration_bounds = array<i64: 2>, scalar_prefetch = 0 : i64, scratch_operands = 0 : i64, tpu.core_type = #tpu.core_type<tc>, window_params = [{transform_indices = @transform_0, window_bounds = array<i64: 1, 4, 256>}, {transform_indices = @transform_1, window_bounds = array<i64: 1, 4, 256>}, {pipeline_mode = #tpu.pipeline_mode<synchronous>, transform_indices = @transform_2, window_bounds = array<i64: 8, 4>}, {pipeline_mode = #tpu.pipeline_mode<synchronous>, transform_indices = @transform_3, window_bounds = array<i64: 8, 1>}, {pipeline_mode = #tpu.pipeline_mode<synchronous>, transform_indices = @transform_4, window_bounds = array<i64: 4, 4>}, {pipeline_mode = #tpu.pipeline_mode<synchronous>, transform_indices = @transform_5, window_bounds = array<i64: 4, 1>}, {transform_indices = @transform_6, window_bounds = array<i64: 1, 4, 256>}]} {
    %c0 = arith.constant 0 : index
    %c0_0 = arith.constant 0 : index
    %0 = vector.load %arg3[%c0, %c0_0] : memref<8x4xf32, #tpu.memory_space<vmem>>, vector<8x4xf32>
    %c0_1 = arith.constant 0 : index
    %c0_2 = arith.constant 0 : index
    %1 = vector.load %arg4[%c0_1, %c0_2] : memref<8x1xf32, #tpu.memory_space<vmem>>, vector<8x1xf32>
    %c0_3 = arith.constant 0 : index
    %c0_4 = arith.constant 0 : index
    %2 = vector.load %arg5[%c0_3, %c0_4] : memref<4x4xf32, #tpu.memory_space<vmem>>, vector<4x4xf32>
    %c0_5 = arith.constant 0 : index
    %c0_6 = arith.constant 0 : index
    %3 = vector.load %arg6[%c0_5, %c0_6] : memref<4x1xf32, #tpu.memory_space<vmem>>, vector<4x1xf32>
    %c0_7 = arith.constant 0 : index
    %c0_8 = arith.constant 0 : index
    %c0_9 = arith.constant 0 : index
    %4 = vector.load %arg1[%c0_7, %c0_8, %c0_9] : memref<1x4x256xf32, #tpu.memory_space<vmem>>, vector<1x4x256xf32>
    %5 = vector.shape_cast %4 : vector<1x4x256xf32> to vector<4x256xf32>
    %c0_10 = arith.constant 0 : index
    %c0_11 = arith.constant 0 : index
    %c0_12 = arith.constant 0 : index
    %6 = vector.load %arg2[%c0_10, %c0_11, %c0_12] : memref<1x4x256xf32, #tpu.memory_space<vmem>>, vector<1x4x256xf32>
    %7 = vector.shape_cast %6 : vector<1x4x256xf32> to vector<4x256xf32>
    %cst = arith.constant dense<0.000000e+00> : vector<8x256xf32>
    %8 = tpu.matmul %0, %5, %cst {dimension_numbers = #tpu.dot_dimension_numbers<[1], [0], [0], [1], [0, 0, 1, 1], [], []>} : vector<8x4xf32>, vector<4x256xf32>, vector<8x256xf32> -> vector<8x256xf32>
    %9 = vector.broadcast %1 : vector<8x1xf32> to vector<8x256xf32>
    %10 = arith.addf %8, %9 : vector<8x256xf32>
    %11 = vector.extract_strided_slice %10 {offsets = [0, 0], sizes = [4, 256], strides = [1, 1]} : vector<8x256xf32> to vector<4x256xf32>
    %12 = vector.extract_strided_slice %10 {offsets = [4, 0], sizes = [4, 256], strides = [1, 1]} : vector<8x256xf32> to vector<4x256xf32>
    %cst_13 = arith.constant dense<0.000000e+00> : vector<4xf32>
    %13 = vector.multi_reduction <add>, %12, %cst_13 [1] : vector<4x256xf32> to vector<4xf32>
    %14 = vector.shape_cast %13 : vector<4xf32> to vector<4x1xf32>
    %cst_14 = arith.constant 3.906250e-03 : f32
    %15 = vector.broadcast %cst_14 : f32 to vector<4x1xf32>
    %16 = arith.mulf %14, %15 : vector<4x1xf32>
    %17 = vector.broadcast %16 : vector<4x1xf32> to vector<4x256xf32>
    %18 = arith.mulf %11, %17 : vector<4x256xf32>
    %cst_15 = arith.constant dense<0.000000e+00> : vector<256xf32>
    %19 = vector.multi_reduction <add>, %18, %cst_15 [0] : vector<4x256xf32> to vector<256xf32>
    %20 = vector.shape_cast %19 : vector<256xf32> to vector<1x256xf32>
    %21 = arith.negf %20 : vector<1x256xf32>
    %22 = math.exp %21 : vector<1x256xf32>
    %cst_16 = arith.constant 1.000000e+00 : f32
    %23 = vector.broadcast %cst_16 : f32 to vector<1x256xf32>
    %24 = arith.addf %23, %22 : vector<1x256xf32>
    %25 = arith.divf %23, %24 : vector<1x256xf32>
    %cst_17 = arith.constant dense<0.000000e+00> : vector<4x256xf32>
    %26 = tpu.matmul %2, %7, %cst_17 {dimension_numbers = #tpu.dot_dimension_numbers<[1], [0], [0], [1], [0, 0, 1, 1], [], []>} : vector<4x4xf32>, vector<4x256xf32>, vector<4x256xf32> -> vector<4x256xf32>
    %27 = vector.broadcast %3 : vector<4x1xf32> to vector<4x256xf32>
    %28 = arith.addf %26, %27 : vector<4x256xf32>
    %29 = vector.broadcast %25 : vector<1x256xf32> to vector<4x256xf32>
    %30 = arith.mulf %28, %29 : vector<4x256xf32>
    %c0_18 = arith.constant 0 : index
    %c0_19 = arith.constant 0 : index
    %c0_20 = arith.constant 0 : index
    %31 = vector.load %arg7[%c0_18, %c0_19, %c0_20] : memref<1x4x256xf32, #tpu.memory_space<vmem>>, vector<1x4x256xf32>
    %32 = vector.shape_cast %31 : vector<1x4x256xf32> to vector<4x256xf32>
    %33 = vector.shape_cast %30 : vector<4x256xf32> to vector<1x4x256xf32>
    tpu.vector_store %arg7[%c0_18, %c0_19, %c0_20], %33 {strides = array<i32>} : memref<1x4x256xf32, #tpu.memory_space<vmem>>, vector<1x4x256xf32>,
    return
  }
  func.func @transform_0(%arg0: i32) -> (i32, i32, i32) {
    %c0_i32 = arith.constant 0 : i32
    %c0_i32_0 = arith.constant 0 : i32
    %c0_i32_1 = arith.constant 0 : i32
    return %arg0, %c0_i32, %c0_i32_0 : i32, i32, i32
  }
  func.func @transform_1(%arg0: i32) -> (i32, i32, i32) {
    %c0_i32 = arith.constant 0 : i32
    %c0_i32_0 = arith.constant 0 : i32
    %c0_i32_1 = arith.constant 0 : i32
    return %arg0, %c0_i32, %c0_i32_0 : i32, i32, i32
  }
  func.func @transform_2(%arg0: i32) -> (i32, i32) {
    %c0_i32 = arith.constant 0 : i32
    %c0_i32_0 = arith.constant 0 : i32
    %c0_i32_1 = arith.constant 0 : i32
    return %c0_i32, %c0_i32_0 : i32, i32
  }
  func.func @transform_3(%arg0: i32) -> (i32, i32) {
    %c0_i32 = arith.constant 0 : i32
    %c0_i32_0 = arith.constant 0 : i32
    %c0_i32_1 = arith.constant 0 : i32
    return %c0_i32, %c0_i32_0 : i32, i32
  }
  func.func @transform_4(%arg0: i32) -> (i32, i32) {
    %c0_i32 = arith.constant 0 : i32
    %c0_i32_0 = arith.constant 0 : i32
    %c0_i32_1 = arith.constant 0 : i32
    return %c0_i32, %c0_i32_0 : i32, i32
  }
  func.func @transform_5(%arg0: i32) -> (i32, i32) {
    %c0_i32 = arith.constant 0 : i32
    %c0_i32_0 = arith.constant 0 : i32
    %c0_i32_1 = arith.constant 0 : i32
    return %c0_i32, %c0_i32_0 : i32, i32
  }
  func.func @transform_6(%arg0: i32) -> (i32, i32, i32) {
    %c0_i32 = arith.constant 0 : i32
    %c0_i32_0 = arith.constant 0 : i32
    %c0_i32_1 = arith.constant 0 : i32
    return %arg0, %c0_i32, %c0_i32_0 : i32, i32, i32
  }
}

</mosaic_0001>

<llo_original>
// kernel: tpu_custom_call.1
$region0: #{tpu_custom_call.1}
  #allocation0 [shape = 'u32[]', space=smem, size = 0x4, offset = 0x4, fixed_abs, tag = 'smem constant byte address 0x4 - core index']
  #allocation1 [shape = 'u32[144,128]{1,0:T(1,128)}', space=vmem, size = 0x12000, scoped, tag = 'internal scratch']
  %s0 = inlined_call_operand.vmem [shape: f32[2,4,256], index: 0, kind: input, shape index: {}]
  %s1 = inlined_call_operand.hbm [shape: f32[2,4,256], index: 1, kind: input, shape index: {}]
  %s2 = inlined_call_operand.vmem [shape: f32[8,4], index: 2, kind: input, shape index: {}]
  %s3 = inlined_call_operand.vmem [shape: f32[8,1], index: 3, kind: input, shape index: {}]
  %s4 = inlined_call_operand.vmem [shape: f32[4,4], index: 4, kind: input, shape index: {}]
  %s5 = inlined_call_operand.vmem [shape: f32[4,1], index: 5, kind: input, shape index: {}]
  %s6 = inlined_call_operand.hbm [shape: f32[2,4,256], index: 6, kind: output, shape index: {}]
  %s7 = sld [smem:[#allocation0]]
  $region61: #{tpu_custom_call.1} parent=0
    _
  %s9 = ssub.s32 1, %s7
  %s10 = scalar_select 0, %s9, %s7
  $region1: #{tpu_custom_call.1} parent=0
    #allocation2 [shape = 'u8[8192]{0}', space=vmem, size = 0x2000, scoped, tag = 'input window, operand 1']
    #allocation3 [shape = 's32[2]{0}', space=sflag, size = 0x8, scoped, tag = 'scoped memory for tpu_custom_call.1']
    #allocation4 [shape = 's32[2]{0}', space=sflag, size = 0x8, scoped, tag = 'scoped memory for tpu_custom_call.1']
    #allocation5 [shape = 'u8[8192]{0}', space=vmem, size = 0x2000, scoped, tag = 'output window, operand 0']
    %11 = vsyncpa [#allocation3], 0
    %s12 = scalar_lea.sflag [#allocation3], 1
    %13 = vsyncpa %s12, 0
    %14 = vsyncpa [#allocation4], 0
    %s15 = scalar_lea.sflag [#allocation4], 1
    %16 = vsyncpa %s15, 0
    loop: start=0, step=1, limit=4
    $region2: #{tpu_custom_call.1} parent=1 // loop_pre_header
      _
    $region3: #{tpu_custom_call.1} parent=1 // loop_header
      %s18 = sphi 0, %s22
      %p19 = scmp.ge.s32.totalorder %s18, 4
      %s28 = sphi 0, %s30
      %s31 = sphi 0, %s28
      %s32 = sphi 0, %s31
      %s48 = sphi 0, %s32
      %s54 = sphi 0, %s56
      %s57 = sphi 0, %s54
      %s58 = sphi 0, %s57
      %s74 = sphi 0, %s58
      %s78 = sphi 0, %s78
      %s80 = sphi 0, %s78
      %s81 = sphi 0, %s80
      %s95 = sphi 0, %s81
      %s99 = sphi 0, %s99
      %s101 = sphi 0, %s99
      %s102 = sphi 0, %s101
      %s116 = sphi 0, %s102
      %s120 = sphi 0, %s120
      %s122 = sphi 0, %s120
      %s123 = sphi 0, %s122
      %s137 = sphi 0, %s123
      %s141 = sphi 0, %s141
      %s143 = sphi 0, %s141
      %s144 = sphi 0, %s143
      %s158 = sphi 0, %s144
      %s164 = sphi 0, %s166
      %s167 = sphi 0, %s164
      %s168 = sphi 0, %s167
      %s184 = sphi 0, %s168
    $region4: #{tpu_custom_call.1} parent=1 // loop_header_branch
      %21 = sbr.rel (%p19) target = $region8
    $region5: #{tpu_custom_call.1} parent=1 // loop_body
      %s23 = ssub.s32 %s18, 1
      %s24 = ssub.s32 %s18, 2
      %s25 = sadd.s32 %s18, 1
      %s26 = ssub.s32 %s18, %s25
      %p27 = scmp.eq.s32.totalorder %s26, 0
      %s29 = sadd.s32 %s28, 1
      %s30 = scalar_select %p27, %s28, %s29
      %p33 = pneg %p27
      %p34 = scmp.eq.s32.totalorder %s18, 1
      %p35 = por %p33, %p34
      %p36 = scmp.ne.s32.totalorder %s28, %s31
      %p37 = scmp.eq.s32.totalorder %s18, 0
      %p38 = por %p36, %p37
      %p39 = scmp.ne.s32.totalorder %s28, %s31
      %p40 = scmp.eq.s32.totalorder %s23, 1
      %p41 = por %p39, %p40
      %p42 = scmp.ne.s32.totalorder %s31, %s32
      %p43 = scmp.eq.s32.totalorder %s23, 0
      %p44 = por %p42, %p43
      %p45 = scmp.ne.s32.totalorder %s31, %s32
      %p46 = scmp.eq.s32.totalorder %s24, 1
      %p47 = por %p45, %p46
      %p49 = scmp.ne.s32.totalorder %s32, %s48
      %p50 = scmp.eq.s32.totalorder %s24, 0
      %p51 = por %p49, %p50
      %s52 = ssub.s32 %s18, %s25
      %p53 = scmp.eq.s32.totalorder %s52, 0
      %s55 = sadd.s32 %s54, 1
      %s56 = scalar_select %p53, %s54, %s55
      %p59 = pneg %p53
      %p60 = scmp.eq.s32.totalorder %s18, 1
      %p61 = por %p59, %p60
      %p62 = scmp.ne.s32.totalorder %s54, %s57
      %p63 = scmp.eq.s32.totalorder %s18, 0
      %p64 = por %p62, %p63
      %p65 = scmp.ne.s32.totalorder %s54, %s57
      %p66 = scmp.eq.s32.totalorder %s23, 1
      %p67 = por %p65, %p66
      %p68 = scmp.ne.s32.totalorder %s57, %s58
      %p69 = scmp.eq.s32.totalorder %s23, 0
      %p70 = por %p68, %p69
      %p71 = scmp.ne.s32.totalorder %s57, %s58
      %p72 = scmp.eq.s32.totalorder %s24, 1
      %p73 = por %p71, %p72
      %p75 = scmp.ne.s32.totalorder %s58, %s74
      %p76 = scmp.eq.s32.totalorder %s24, 0
      %p77 = por %p75, %p76
      %s79 = sadd.s32 %s78, 1
      %p82 = scmp.eq.s32.totalorder %s18, 1
      %p83 = scmp.ne.s32.totalorder %s78, %s80
      %p84 = scmp.eq.s32.totalorder %s18, 0
      %p85 = por %p83, %p84
      %p86 = scmp.ne.s32.totalorder %s78, %s80
      %p87 = scmp.eq.s32.totalorder %s23, 1
      %p88 = por %p86, %p87
      %p89 = scmp.ne.s32.totalorder %s80, %s81
      %p90 = scmp.eq.s32.totalorder %s23, 0
      %p91 = por %p89, %p90
      %p92 = scmp.ne.s32.totalorder %s80, %s81
      %p93 = scmp.eq.s32.totalorder %s24, 1
      %p94 = por %p92, %p93
      %p96 = scmp.ne.s32.totalorder %s81, %s95
      %p97 = scmp.eq.s32.totalorder %s24, 0
      %p98 = por %p96, %p97
      %s100 = sadd.s32 %s99, 1
      %p103 = scmp.eq.s32.totalorder %s18, 1
      %p104 = scmp.ne.s32.totalorder %s99, %s101
      %p105 = scmp.eq.s32.totalorder %s18, 0
      %p106 = por %p104, %p105
      %p107 = scmp.ne.s32.totalorder %s99, %s101
      %p108 = scmp.eq.s32.totalorder %s23, 1
      %p109 = por %p107, %p108
      %p110 = scmp.ne.s32.totalorder %s101, %s102
      %p111 = scmp.eq.s32.totalorder %s23, 0
      %p112 = por %p110, %p111
      %p113 = scmp.ne.s32.totalorder %s101, %s102
      %p114 = scmp.eq.s32.totalorder %s24, 1
      %p115 = por %p113, %p114
      %p117 = scmp.ne.s32.totalorder %s102, %s116
      %p118 = scmp.eq.s32.totalorder %s24, 0
      %p119 = por %p117, %p118
      %s121 = sadd.s32 %s120, 1
      %p124 = scmp.eq.s32.totalorder %s18, 1
      %p125 = scmp.ne.s32.totalorder %s120, %s122
      %p126 = scmp.eq.s32.totalorder %s18, 0
      %p127 = por %p125, %p126
      %p128 = scmp.ne.s32.totalorder %s120, %s122
      %p129 = scmp.eq.s32.totalorder %s23, 1
      %p130 = por %p128, %p129
      %p131 = scmp.ne.s32.totalorder %s122, %s123
      %p132 = scmp.eq.s32.totalorder %s23, 0
      %p133 = por %p131, %p132
      %p134 = scmp.ne.s32.totalorder %s122, %s123
      %p135 = scmp.eq.s32.totalorder %s24, 1
      %p136 = por %p134, %p135
      %p138 = scmp.ne.s32.totalorder %s123, %s137
      %p139 = scmp.eq.s32.totalorder %s24, 0
      %p140 = por %p138, %p139
      %s142 = sadd.s32 %s141, 1
      %p145 = scmp.eq.s32.totalorder %s18, 1
      %p146 = scmp.ne.s32.totalorder %s141, %s143
      %p147 = scmp.eq.s32.totalorder %s18, 0
      %p148 = por %p146, %p147
      %p149 = scmp.ne.s32.totalorder %s141, %s143
      %p150 = scmp.eq.s32.totalorder %s23, 1
      %p151 = por %p149, %p150
      %p152 = scmp.ne.s32.totalorder %s143, %s144
      %p153 = scmp.eq.s32.totalorder %s23, 0
      %p154 = por %p152, %p153
      %p155 = scmp.ne.s32.totalorder %s143, %s144
      %p156 = scmp.eq.s32.totalorder %s24, 1
      %p157 = por %p155, %p156
      %p159 = scmp.ne.s32.totalorder %s144, %s158
      %p160 = scmp.eq.s32.totalorder %s24, 0
      %p161 = por %p159, %p160
      %s162 = ssub.s32 %s18, %s25
      %p163 = scmp.eq.s32.totalorder %s162, 0
      %s165 = sadd.s32 %s164, 1
      %s166 = scalar_select %p163, %s164, %s165
      %p169 = pneg %p163
      %p170 = scmp.eq.s32.totalorder %s18, 1
      %p171 = por %p169, %p170
      %p172 = scmp.ne.s32.totalorder %s164, %s167
      %p173 = scmp.eq.s32.totalorder %s18, 0
      %p174 = por %p172, %p173
      %p175 = scmp.ne.s32.totalorder %s164, %s167
      %p176 = scmp.eq.s32.totalorder %s23, 1
      %p177 = por %p175, %p176
      %p178 = scmp.ne.s32.totalorder %s167, %s168
      %p179 = scmp.eq.s32.totalorder %s23, 0
      %p180 = por %p178, %p179
      %p181 = scmp.ne.s32.totalorder %s167, %s168
      %p182 = scmp.eq.s32.totalorder %s24, 1
      %p183 = por %p181, %p182
      %p185 = scmp.ne.s32.totalorder %s168, %s184
      %p186 = scmp.eq.s32.totalorder %s24, 0
      %p187 = por %p185, %p186
      %p188 = scmp.le.s32.totalorder 1, %s18
      %p189 = scmp.lt.s32.totalorder %s18, 3
      %p190 = pnand %p188, %p189
      %p191 = pneg %p190
      // Predicated region
      $region9: #{tpu_custom_call.1} parent=5 // pred_check
        _
      $region10: #{tpu_custom_call.1} parent=5 // pred_check_branch
        %193 = sbr.rel (%p190) target = $region12
      $region11: #{tpu_custom_call.1} parent=5 // pred_region
        %s194 = ssub.s32 %s18, 1
        // Predicated region
        $region13: #{tpu_custom_call.1} parent=11 // pred_check
          %p195 = pneg %p91
        $region14: #{tpu_custom_call.1} parent=11 // pred_check_branch
          %197 = sbr.rel (%p195) target = $region16
        $region15: #{tpu_custom_call.1} parent=11 // pred_region
          _
        $region16: #{tpu_custom_call.1} parent=11 // pred_fallthru
          _
        // Predicated region
        $region17: #{tpu_custom_call.1} parent=11 // pred_check
          %p198 = pneg %p112
        $region18: #{tpu_custom_call.1} parent=11 // pred_check_branch
          %200 = sbr.rel (%p198) target = $region20
        $region19: #{tpu_custom_call.1} parent=11 // pred_region
          _
        $region20: #{tpu_custom_call.1} parent=11 // pred_fallthru
          _
        // Predicated region
        $region21: #{tpu_custom_call.1} parent=11 // pred_check
          %p201 = pneg %p133
        $region22: #{tpu_custom_call.1} parent=11 // pred_check_branch
          %203 = sbr.rel (%p201) target = $region24
        $region23: #{tpu_custom_call.1} parent=11 // pred_region
          _
        $region24: #{tpu_custom_call.1} parent=11 // pred_fallthru
          _
        // Predicated region
        $region25: #{tpu_custom_call.1} parent=11 // pred_check
          %p204 = pneg %p154
        $region26: #{tpu_custom_call.1} parent=11 // pred_check_branch
          %206 = sbr.rel (%p204) target = $region28
        $region27: #{tpu_custom_call.1} parent=11 // pred_region
          _
        $region28: #{tpu_custom_call.1} parent=11 // pred_fallthru
          _
      $region12: #{tpu_custom_call.1} parent=5 // pred_fallthru
        _
      %p207 = scmp.lt.s32.totalorder %s18, 2
      // Predicated region
      $region29: #{tpu_custom_call.1} parent=5 // pred_check
        %p208 = pneg %p207
      $region30: #{tpu_custom_call.1} parent=5 // pred_check_branch
        %210 = sbr.rel (%p208) target = $region32
      $region31: #{tpu_custom_call.1} parent=5 // pred_region
        // Predicated region
        $region33: #{tpu_custom_call.1} parent=31 // pred_check
          %p211 = pneg %p38
        $region34: #{tpu_custom_call.1} parent=31 // pred_check_branch
          %213 = sbr.rel (%p211) target = $region36
        $region35: #{tpu_custom_call.1} parent=31 // pred_region
          %p214 = scmp.lt.s32.totalorder %s18, 1
          %s215 = scalar_select %p214, %s18, 1
          %s216 = smul.addr %s215, 2
          %s217 = smul.addr %s216, 4
          %s218 = scalar_lea.vmem %s0, %s217
        $region36: #{tpu_custom_call.1} parent=31 // pred_fallthru
          _
        // Predicated region
        $region37: #{tpu_custom_call.1} parent=31 // pred_check
          %p219 = pneg %p64
        $region38: #{tpu_custom_call.1} parent=31 // pred_check_branch
          %221 = sbr.rel (%p219) target = $region40
        $region39: #{tpu_custom_call.1} parent=31 // pred_region
          %s222 = sand.u32 %s54, 1
          %s223 = scalar_lea.sflag [#allocation3], %s222
          %s224 = sand.u32 %s54, 1
          %s225 = smul.addr %s224, 8
          %s226 = scalar_lea.vmem [#allocation2], %s225
          %s228 = ssub.s32 128, 128
          %229 = vsyncadd %s223, %s228
          %s230 = smul.addr %s18, 2
          %s231 = smul.addr %s230, 64
          %s232 = scalar_lea.hbm %s1, %s231
          %s234 = sshll.u32 %s226, 4
          %s235 = int_to_ptr.vmem [resolvable:$true] %s234
          %237 = dma.hbm_to_vmem [thread:$0]  %s232, 128, %s235, %s223
        $region40: #{tpu_custom_call.1} parent=31 // pred_fallthru
          _
      $region32: #{tpu_custom_call.1} parent=5 // pred_fallthru
        _
      %p238 = scmp.le.s32.totalorder 1, %s18
      %p239 = scmp.lt.s32.totalorder %s18, 3
      %p240 = pnand %p238, %p239
      %p241 = pneg %p240
      // Predicated region
      $region41: #{tpu_custom_call.1} parent=5 // pred_check
        _
      $region42: #{tpu_custom_call.1} parent=5 // pred_check_branch
        %243 = sbr.rel (%p240) target = $region44
      $region43: #{tpu_custom_call.1} parent=5 // pred_region
        %s244 = ssub.s32 %s18, 1
        %s245 = sand.u32 %s57, 1
        %s246 = scalar_lea.sflag [#allocation3], %s245
        %s247 = sand.u32 %s57, 1
        %s248 = smul.addr %s247, 8
        %s249 = scalar_lea.vmem [#allocation2], %s248
        // Predicated region
        $region45: #{tpu_custom_call.1} parent=43 // pred_check
          %p250 = pneg %p70
        $region46: #{tpu_custom_call.1} parent=43 // pred_check_branch
          %252 = sbr.rel (%p250) target = $region48
        $region47: #{tpu_custom_call.1} parent=43 // pred_region
          %253 = dma.done %s246, 128
        $region48: #{tpu_custom_call.1} parent=43 // pred_fallthru
          _
        %p254 = scmp.lt.s32.totalorder %s23, 1
        %s255 = scalar_select %p254, %s23, 1
        %s256 = smul.addr %s255, 2
        %s257 = smul.addr %s256, 4
        %s258 = scalar_lea.vmem %s0, %s257
        %p259 = pneg %p44
        %p260 = pneg %p41
        %s261 = sand.u32 %s57, 1
        %s262 = scalar_lea.sflag [#allocation3], %s261
        %s263 = sand.u32 %s57, 1
        %s264 = smul.addr %s263, 8
        %s265 = scalar_lea.vmem [#allocation2], %s264
        %p266 = pneg %p70
        %p267 = pneg %p67
        %p268 = pneg %p91
        %p269 = pneg %p88
        %p270 = pneg %p112
        %p271 = pneg %p109
        %p272 = pneg %p133
        %p273 = pneg %p130
        %p274 = pneg %p154
        %p275 = pneg %p151
        %p276 = pneg %p180
        %p277 = pneg %p177
        %s278 = sand.u32 %s167, 1
        %s279 = scalar_lea.sflag [#allocation4], %s278
        %s280 = sand.u32 %s167, 1
        %s281 = smul.addr %s280, 8
        %s282 = scalar_lea.vmem [#allocation5], %s281
        %p283 = scmp.lt.s32.totalorder %s23, 1
        %s284 = scalar_select %p283, %s23, 1
        %s285 = smul.addr %s284, 2
        %s286 = smul.addr %s285, 4
        %s287 = scalar_lea.vmem %s0, %s286
        %v288 = vld [vmem:[%s2] sm:$0xff]
        %v289 = vld [vmem:[%s3] sm:$0xff]
        %v290 = vld [vmem:[%s4] sm:$0xf]
        %v291 = vld [vmem:[%s5] sm:$0xf]
        %v292 = vld [vmem:[%s287] sm:$0xff]
        %v293 = vld [vmem:[%s249] sm:$0xff]
        %295 = vset.pattern.permute.xlu0 0
        %296 = vperm.xlu0 %295, %v289
        %v297 = vpop.permute.xlu0 %296
        %v300 = vcombine.high %v292, %v292
        %vm301 = vcmask 31744
        %v303 = vsel %vm301, %v288, 0
        %vm305 = vcmask 1043456
        %v306 = vsel %vm305, %v292, 0
        %v308 = vsel %vm305, %v300, 0
        %310 = vmatprep.subr.mxu0 %v308
        %311 = vmatpush1.msra.mxu0 %v306
        %312 = vmatprep.subr.mxu0 0.0
        %313 = vmatpush1.msra.mxu0 0.0
        %314 = vmatprep.subr.mxu0 0.0
        %315 = vmatpush1.msra.mxu0 0.0
        %316 = vmatprep.subr.mxu0 0.0
        %317 = vmatpush1.msra.mxu0 0.0
        %318 = vmatprep.subr.mxu0 0.0
        %319 = vmatpush1.msra.mxu0 0.0
        %320 = vmatprep.subr.mxu0 0.0
        %321 = vmatpush1.msra.mxu0 0.0
        %322 = vmatprep.subr.mxu0 0.0
        %323 = vmatpush1.msra.mxu0 0.0
        %324 = vmatprep.subr.mxu0 0.0
        %325 = vmatpush1.msra.mxu0 0.0
        %326 = vmatprep.subr.mxu0 0.0
        %327 = vmatpush1.msra.mxu0 0.0
        %328 = vmatprep.subr.mxu0 0.0
        %329 = vmatpush1.msra.mxu0 0.0
        %330 = vmatprep.subr.mxu0 0.0
        %331 = vmatpush1.msra.mxu0 0.0
        %332 = vmatprep.subr.mxu0 0.0
        %333 = vmatpush1.msra.mxu0 0.0
        %334 = vmatprep.subr.mxu0 0.0
        %335 = vmatpush1.msra.mxu0 0.0
        %336 = vmatprep.subr.mxu0 0.0
        %337 = vmatpush1.msra.mxu0 0.0
        %338 = vmatprep.subr.mxu0 0.0
        %339 = vmatpush1.msra.mxu0 0.0
        %340 = vmatprep.subr.mxu0 0.0
        %341 = vmatpush1.msra.mxu0 0.0
        %342 = vmatprep.subr.mxu0 0.0
        %343 = vmatpush1.msra.mxu0 0.0
        %344 = vmatprep.subr.mxu0 0.0
        %345 = vmatpush1.msra.mxu0 0.0
        %346 = vmatprep.subr.mxu0 0.0
        %347 = vmatpush1.msra.mxu0 0.0
        %348 = vmatprep.subr.mxu0 0.0
        %349 = vmatpush1.msra.mxu0 0.0
        %350 = vmatprep.subr.mxu0 0.0
        %351 = vmatpush1.msra.mxu0 0.0
        %352 = vmatprep.subr.mxu0 0.0
        %353 = vmatpush1.msra.mxu0 0.0
        %354 = vmatprep.subr.mxu0 0.0
        %355 = vmatpush1.msra.mxu0 0.0
        %356 = vmatprep.subr.mxu0 0.0
        %357 = vmatpush1.msra.mxu0 0.0
        %358 = vmatprep.subr.mxu0 0.0
        %359 = vmatpush1.msra.mxu0 0.0
        %360 = vmatprep.subr.mxu0 0.0
        %361 = vmatpush1.msra.mxu0 0.0
        %362 = vmatprep.subr.mxu0 0.0
        %363 = vmatpush1.msra.mxu0 0.0
        %364 = vmatprep.subr.mxu0 0.0
        %365 = vmatpush1.msra.mxu0 0.0
        %366 = vmatprep.subr.mxu0 0.0
        %367 = vmatpush1.msra.mxu0 0.0
        %368 = vmatprep.subr.mxu0 0.0
        %369 = vmatpush1.msra.mxu0 0.0
        %370 = vmatprep.subr.mxu0 0.0
        %371 = vmatpush1.msra.mxu0 0.0
        %372 = vmatprep.subr.mxu0 0.0
        %373 = vmatpush1.msra.mxu0 0.0
        %374 = vmatprep.mubr.f32.mxu0 0.0
        %375 = vmatmul.mubr.f32.gmra.mrb[0].mxu0 %v303
        %v376 = vpop.f32.mrb[0].mxu0
        %v377 = vadd.f32 %v297, %v376
        %v378 = vpop.f32.mrb[0].mxu0
        %v379 = vadd.f32 %v297, %v378
        %380 = vdwg.mxu0
        %vm381 = vcmask 1047556
        %v382 = vsel %vm381, %v377, 0.0
        %v383 = vsel %vm381, %v379, 0.0
        %v384 = vadd.f32 %v382, %v383
        %385 = vadd.xlane.f32.xlu0 %v384
        %v386 = vpop.xlane.xlu0 %385
        %v387 = vmul.f32 %v386, 0.00390625
        %v389 = vrot.slane %v387, 4
        %v391 = vmul.f32 %v377, %v389
        %v392 = vmul.f32 %v379, %v389
        %v393 = vsel %vm305, %v391, 0.0
        %v394 = vrot.slane %v393, 4
        %v395 = vadd.f32 %v393, %v394
        %v396 = vrot.slane %v395, 2
        %v397 = vadd.f32 %v395, %v396
        %v398 = vrot.slane %v397, 1
        %v399 = vadd.f32 %v397, %v398
        %v400 = vsel %vm305, %v392, 0.0
        %v401 = vrot.slane %v400, 4
        %v402 = vadd.f32 %v400, %v401
        %v403 = vrot.slane %v402, 2
        %v404 = vadd.f32 %v402, %v403
        %v405 = vrot.slane %v404, 1
        %v406 = vadd.f32 %v404, %v405
        %v407 = vxor.u32 %v399, 2147483648
        %v408 = vxor.u32 %v406, 2147483648
        %v409 = vmul.f32 %v407, 1.442695
        %v410 = vpow.pop %v409
        %v411 = vmul.f32 %v408, 1.442695
        %v412 = vpow.pop %v411
        %v413 = vadd.f32 %v410, 1.0
        %v414 = vadd.f32 %v412, 1.0
        %v415 = vrcp.pop %v413
        %v416 = vmul.f32 1.0, %v415
        %v417 = vrcp.pop %v414
        %v418 = vmul.f32 1.0, %v417
        %420 = vset.pattern.permute.xlu0 0
        %421 = vperm.xlu0 %420, %v291
        %v422 = vpop.permute.xlu0 %421
        %v425 = vcombine.high %v293, %v293
        %v427 = vsel %vm301, %v290, 0
        %v429 = vsel %vm305, %v293, 0
        %v431 = vsel %vm305, %v425, 0
        %433 = vmatprep.subr.mxu0 %v431
        %434 = vmatpush1.msra.mxu0 %v429
        %435 = vmatprep.subr.mxu0 0.0
        %436 = vmatpush1.msra.mxu0 0.0
        %437 = vmatprep.subr.mxu0 0.0
        %438 = vmatpush1.msra.mxu0 0.0
        %439 = vmatprep.subr.mxu0 0.0
        %440 = vmatpush1.msra.mxu0 0.0
        %441 = vmatprep.subr.mxu0 0.0
        %442 = vmatpush1.msra.mxu0 0.0
        %443 = vmatprep.subr.mxu0 0.0
        %444 = vmatpush1.msra.mxu0 0.0
        %445 = vmatprep.subr.mxu0 0.0
        %446 = vmatpush1.msra.mxu0 0.0
        %447 = vmatprep.subr.mxu0 0.0
        %448 = vmatpush1.msra.mxu0 0.0
        %449 = vmatprep.subr.mxu0 0.0
        %450 = vmatpush1.msra.mxu0 0.0
        %451 = vmatprep.subr.mxu0 0.0
        %452 = vmatpush1.msra.mxu0 0.0
        %453 = vmatprep.subr.mxu0 0.0
        %454 = vmatpush1.msra.mxu0 0.0
        %455 = vmatprep.subr.mxu0 0.0
        %456 = vmatpush1.msra.mxu0 0.0
        %457 = vmatprep.subr.mxu0 0.0
        %458 = vmatpush1.msra.mxu0 0.0
        %459 = vmatprep.subr.mxu0 0.0
        %460 = vmatpush1.msra.mxu0 0.0
        %461 = vmatprep.subr.mxu0 0.0
        %462 = vmatpush1.msra.mxu0 0.0
        %463 = vmatprep.subr.mxu0 0.0
        %464 = vmatpush1.msra.mxu0 0.0
        %465 = vmatprep.subr.mxu0 0.0
        %466 = vmatpush1.msra.mxu0 0.0
        %467 = vmatprep.subr.mxu0 0.0
        %468 = vmatpush1.msra.mxu0 0.0
        %469 = vmatprep.subr.mxu0 0.0
        %470 = vmatpush1.msra.mxu0 0.0
        %471 = vmatprep.subr.mxu0 0.0
        %472 = vmatpush1.msra.mxu0 0.0
        %473 = vmatprep.subr.mxu0 0.0
        %474 = vmatpush1.msra.mxu0 0.0
        %475 = vmatprep.subr.mxu0 0.0
        %476 = vmatpush1.msra.mxu0 0.0
        %477 = vmatprep.subr.mxu0 0.0
        %478 = vmatpush1.msra.mxu0 0.0
        %479 = vmatprep.subr.mxu0 0.0
        %480 = vmatpush1.msra.mxu0 0.0
        %481 = vmatprep.subr.mxu0 0.0
        %482 = vmatpush1.msra.mxu0 0.0
        %483 = vmatprep.subr.mxu0 0.0
        %484 = vmatpush1.msra.mxu0 0.0
        %485 = vmatprep.subr.mxu0 0.0
        %486 = vmatpush1.msra.mxu0 0.0
        %487 = vmatprep.subr.mxu0 0.0
        %488 = vmatpush1.msra.mxu0 0.0
        %489 = vmatprep.subr.mxu0 0.0
        %490 = vmatpush1.msra.mxu0 0.0
        %491 = vmatprep.subr.mxu0 0.0
        %492 = vmatpush1.msra.mxu0 0.0
        %493 = vmatprep.subr.mxu0 0.0
        %494 = vmatpush1.msra.mxu0 0.0
        %495 = vmatprep.subr.mxu0 0.0
        %496 = vmatpush1.msra.mxu0 0.0
        %497 = vmatprep.mubr.f32.mxu0 0.0
        %498 = vmatmul.mubr.f32.gmra.mrb[0].mxu0 %v427
        %v499 = vpop.f32.mrb[0].mxu0
        %v500 = vadd.f32 %v422, %v499
        %v501 = vpop.f32.mrb[0].mxu0
        %v502 = vadd.f32 %v422, %v501
        %503 = vdwg.mxu0
        %v504 = vmul.f32 %v500, %v416
        %v505 = vmul.f32 %v502, %v418
        %v508 = vcombine.low %v504, %v505
        %510 = vst [vmem:[%s282] sm:$0xff] %v508
        %s511 = sand.u32 %s167, 1
        %s512 = scalar_lea.sflag [#allocation4], %s511
        %s513 = sand.u32 %s167, 1
        %s514 = smul.addr %s513, 8
        %s515 = scalar_lea.vmem [#allocation5], %s514
        // Predicated region
        $region49: #{tpu_custom_call.1} parent=43 // pred_check
          %p516 = pneg %p177
        $region50: #{tpu_custom_call.1} parent=43 // pred_check_branch
          %518 = sbr.rel (%p516) target = $region52
        $region51: #{tpu_custom_call.1} parent=43 // pred_region
          %s520 = ssub.s32 128, 128
          %521 = vsyncadd %s512, %s520
          %s522 = smul.addr %s23, 2
          %s523 = smul.addr %s522, 64
          %s524 = scalar_lea.hbm %s6, %s523
          %s526 = sshll.u32 %s515, 4
          %s527 = int_to_ptr.vmem [resolvable:$true] %s526
          %529 = dma.vmem_to_hbm [thread:$0]  %s527, 128, %s524, %s512
        $region52: #{tpu_custom_call.1} parent=43 // pred_fallthru
          _
      $region44: #{tpu_custom_call.1} parent=5 // pred_fallthru
        _
      %p530 = scmp.le.s32.totalorder 2, %s18
      // Predicated region
      $region53: #{tpu_custom_call.1} parent=5 // pred_check
        %p531 = pneg %p530
      $region54: #{tpu_custom_call.1} parent=5 // pred_check_branch
        %533 = sbr.rel (%p531) target = $region56
      $region55: #{tpu_custom_call.1} parent=5 // pred_region
        %s534 = ssub.s32 %s18, 2
        // Predicated region
        $region57: #{tpu_custom_call.1} parent=55 // pred_check
          %p535 = pneg %p183
        $region58: #{tpu_custom_call.1} parent=55 // pred_check_branch
          %537 = sbr.rel (%p535) target = $region60
        $region59: #{tpu_custom_call.1} parent=55 // pred_region
          %s538 = sand.u32 %s168, 1
          %s539 = scalar_lea.sflag [#allocation4], %s538
          %s540 = sand.u32 %s168, 1
          %s541 = smul.addr %s540, 8
          %s542 = scalar_lea.vmem [#allocation5], %s541
          %543 = dma.done %s539, 128
        $region60: #{tpu_custom_call.1} parent=55 // pred_fallthru
          _
      $region56: #{tpu_custom_call.1} parent=5 // pred_fallthru
        _
    $region6: #{tpu_custom_call.1} parent=1 // loop_footer
      %s22 = sadd.s32 1, %s18
    $region7: #{tpu_custom_call.1} parent=1 // loop_footer_branch
      %17 = sbr.rel target = $region3
    $region8: #{tpu_custom_call.1} parent=1 // loop_exit
      _
    %544 = vsyncpa [#allocation3], 1
    %s545 = scalar_lea.sflag [#allocation3], 1
    %546 = vsyncpa %s545, 1
    %547 = vsyncpa [#allocation4], 1
    %s548 = scalar_lea.sflag [#allocation4], 1
    %549 = vsyncpa %s548, 1

</llo_original>
